<compile_context>
chip_gen: v7x
topology: tpu7x:2x2x1
jax: 0.10.0
libtpu: 0.0.40
codegen_flags: <defaults>
</compile_context>

<pallas_src>
import functools
import math

import jax
import jax.numpy as jnp
from jax import lax
from jax.experimental import pallas as pl
from jax.experimental.pallas import tpu as pltpu

MASK_VALUE = -1e6  # matches torch masked_softmax fill of -1000000.0


def _flash_attn_kernel(vl_ref, q_ref, k_ref, v_ref, o_ref,
                       m_sc, l_sc, acc_sc, *, scale, tile_k):
    # vl_ref : (B,) int32 in SMEM (scalar prefetch)
    # q_ref  : (tile_q, D)    query tile for batch b (resident across ki)
    # k_ref  : (tile_k, D)    key tile ki for batch b
    # v_ref  : (tile_k, Dv)   value tile ki for batch b
    # o_ref  : (tile_q, Dv)   output tile (written on last ki only)
    # m_sc/l_sc/acc_sc: running max / denom / accumulator (f32 VMEM scratch)
    b = pl.program_id(0)
    ki = pl.program_id(2)

    @pl.when(ki == 0)
    def _():
        m_sc[...] = jnp.full_like(m_sc, -jnp.inf)
        l_sc[...] = jnp.zeros_like(l_sc)
        acc_sc[...] = jnp.zeros_like(acc_sc)

    # Fold 1/sqrt(d) into the small (tile_q, D) Q tile (not the score tile).
    q = q_ref[...] * scale          # native dtype, no f32 upcast
    k = k_ref[...]

    # scores = (Q*scale) @ K^T : contract on the feature axis of both operands
    # (no explicit transpose of K); accumulate in f32 on the MXU.
    s = lax.dot_general(
        q, k,
        dimension_numbers=(((1,), (1,)), ((), ())),
        preferred_element_type=jnp.float32,
    )

    # Mask key columns >= valid_len for this batch element.  This also masks the
    # zero-padded key columns, since vl <= the original (unpadded) Tk.
    vlen = vl_ref[b]
    col = ki * tile_k + lax.broadcasted_iota(jnp.int32, s.shape, 1)
    s = jnp.where(col < vlen, s, MASK_VALUE)

    # Online (flash-style) softmax update.
    m_prev = m_sc[...]
    m_new = jnp.maximum(m_prev, jnp.max(s, axis=-1, keepdims=True))
    alpha = jnp.exp(m_prev - m_new)
    p = jnp.exp(s - m_new)
    l_sc[...] = alpha * l_sc[...] + jnp.sum(p, axis=-1, keepdims=True)
    acc_sc[...] = alpha * acc_sc[...] + jnp.dot(
        p.astype(v_ref.dtype), v_ref[...], preferred_element_type=jnp.float32)
    m_sc[...] = m_new

    # TODO(synk): training-mode nn.Dropout on the attention weights (eval-mode
    # forward == identity; would use pltpu.prng_seed + pltpu.stateful_bernoulli).

    @pl.when(ki == pl.num_programs(2) - 1)
    def _():
        # Deferred normalization: tile_q EUP reciprocals + (tile_q, Dv) multiply
        # instead of a full (tile_q, tile_k) vector divide.
        inv = pl.reciprocal(l_sc[...], approx=True)
        o_ref[...] = (acc_sc[...] * inv).astype(o_ref.dtype)


def _round_up(x, m):
    return ((x + m - 1) // m) * m


def dot_product_attention(queries, keys, values, valid_lens=None, *,
                          tile_q=128, tile_k=256):
    """queries: [B, Tq, D]; keys: [B, Tk, D]; values: [B, Tk, Dv];
    valid_lens: None or int array [B] (per-batch valid key length)."""
    B, Tq, D = queries.shape
    _, Tk, Dk = keys.shape
    _, _, Dv = values.shape
    assert Dk == D and keys.shape[0] == B and values.shape[0] == B
    assert values.shape[1] == Tk
    assert tile_k % 128 == 0, "tile_k must be a multiple of 128"

    scale = 1.0 / math.sqrt(D)

    if valid_lens is None:
        vl = jnp.full((B,), Tk, dtype=jnp.int32)
    else:
        # TODO(synk): 2-D per-query valid_lens ([B, Tq]) not supported here.
        assert valid_lens.ndim == 1 and valid_lens.shape[0] == B
        vl = jnp.minimum(valid_lens.astype(jnp.int32), Tk)

    # --- query-axis tiling (pad so tile_q | Tq_pad; padded rows sliced off) ---
    tile_q = min(tile_q, _round_up(Tq, 8))
    num_q = pl.cdiv(Tq, tile_q)
    Tq_pad = num_q * tile_q
    q = queries
    if Tq_pad != Tq:
        q = jnp.pad(queries, ((0, 0), (0, Tq_pad - Tq), (0, 0)))

    # --- key-axis tiling: pad Tk to a multiple of (128-aligned) tile_k so the
    # score tile's lane dim is dense; padded columns are masked via vl <= Tk ---
    tile_k = min(tile_k, _round_up(Tk, 128))
    num_k = pl.cdiv(Tk, tile_k)
    Tk_pad = num_k * tile_k
    k, v = keys, values
    if Tk_pad != Tk:
        k = jnp.pad(keys, ((0, 0), (0, Tk_pad - Tk), (0, 0)))
        v = jnp.pad(values, ((0, 0), (0, Tk_pad - Tk), (0, 0)))

    # Grid order: B outermost, qi, ki (reduction) innermost — Q/out blocks stay
    # resident across the key axis; B and qi shard across megacore TCs.
    grid = (B, num_q, num_k)

    out = pl.pallas_call(
        functools.partial(_flash_attn_kernel, scale=scale, tile_k=tile_k),
        out_shape=jax.ShapeDtypeStruct((B, Tq_pad, Dv), queries.dtype),
        grid_spec=pltpu.PrefetchScalarGridSpec(
            num_scalar_prefetch=1,
            grid=grid,
            in_specs=[
                pl.BlockSpec((None, tile_q, D), lambda b, qi, ki, vl: (b, qi, 0)),
                pl.BlockSpec((None, tile_k, D), lambda b, qi, ki, vl: (b, ki, 0)),
                pl.BlockSpec((None, tile_k, Dv), lambda b, qi, ki, vl: (b, ki, 0)),
            ],
            out_specs=pl.BlockSpec((None, tile_q, Dv),
                                   lambda b, qi, ki, vl: (b, qi, 0)),
            scratch_shapes=[
                pltpu.VMEM((tile_q, 1), jnp.float32),   # running max m
                pltpu.VMEM((tile_q, 1), jnp.float32),   # running denom l
                pltpu.VMEM((tile_q, Dv), jnp.float32),  # running output acc
            ],
        ),
        compiler_params=pltpu.CompilerParams(
            dimension_semantics=("parallel", "parallel", "arbitrary"),
        ),
    )(vl, q, k, v)

    if Tq_pad != Tq:
        out = out[:, :Tq, :]
    return out


def _reference(queries, keys, values, valid_lens=None):
    """Pure-JAX reference replicating the torch module (eval-mode dropout)."""
    d = queries.shape[-1]
    scores = jnp.einsum("bqd,bkd->bqk", queries, keys,
                        precision=lax.Precision.HIGHEST) / math.sqrt(d)
    if valid_lens is not None:
        Tk = keys.shape[1]
        mask = jnp.arange(Tk)[None, None, :] < valid_lens[:, None, None]
        scores = jnp.where(mask, scores, MASK_VALUE)
    weights = jax.nn.softmax(scores, axis=-1)
    return jnp.einsum("bqk,bkv->bqv", weights, values,
                      precision=lax.Precision.HIGHEST)


if __name__ == "__main__":
    key = jax.random.PRNGKey(0)
    # Tolerance: approx EUP reciprocal + MXU accumulation vs HIGHEST-precision
    # f32 reference — keep a modest (not 1e-7) tolerance.
    ATOL = RTOL = 2e-3

    # --- small shapes consistent with the module: batch=2, seq=8, d=16 ---
    B, Tq, Tk, D, Dv = 2, 8, 8, 16, 16
    kq, kk, kv = jax.random.split(key, 3)
    q = jax.random.normal(kq, (B, Tq, D), jnp.float32)
    k = jax.random.normal(kk, (B, Tk, D), jnp.float32)
    v = jax.random.normal(kv, (B, Tk, Dv), jnp.float32)
    valid_lens = jnp.array([3, 8], dtype=jnp.int32)

    out = jax.block_until_ready(dot_product_attention(q, k, v, valid_lens))
    ref = _reference(q, k, v, valid_lens)
    assert out.shape == (B, Tq, Dv)
    assert jnp.allclose(out, ref, atol=ATOL, rtol=RTOL), "masked case mismatch"

    out_nomask = jax.block_until_ready(dot_product_attention(q, k, v, None))
    ref_nomask = _reference(q, k, v, None)
    assert jnp.allclose(out_nomask, ref_nomask, atol=ATOL, rtol=RTOL), \
        "unmasked case mismatch"

    # --- case exercising query tiling + Tk padding (Tq % 128 != 0, Tk=64) ---
    B2, Tq2, Tk2, D2, Dv2 = 2, 136, 64, 32, 32
    kq2, kk2, kv2 = jax.random.split(jax.random.PRNGKey(1), 3)
    q2 = jax.random.normal(kq2, (B2, Tq2, D2), jnp.float32)
    k2 = jax.random.normal(kk2, (B2, Tk2, D2), jnp.float32)
    v2 = jax.random.normal(kv2, (B2, Tk2, Dv2), jnp.float32)
    vl2 = jnp.array([17, 64], dtype=jnp.int32)

    out2 = jax.block_until_ready(
        dot_product_attention(q2, k2, v2, vl2, tile_q=128, tile_k=128))
    ref2 = _reference(q2, k2, v2, vl2)
    assert out2.shape == (B2, Tq2, Dv2)
    assert jnp.allclose(out2, ref2, atol=ATOL, rtol=RTOL), "tiled-q case mismatch"

    # --- case exercising the online softmax over multiple key tiles (num_k=3,
    # including one tile entirely past valid_len for batch 0) ---
    B3, Tq3, Tk3, D3, Dv3 = 2, 128, 300, 64, 64
    kq3, kk3, kv3 = jax.random.split(jax.random.PRNGKey(2), 3)
    q3 = jax.random.normal(kq3, (B3, Tq3, D3), jnp.float32)
    k3 = jax.random.normal(kk3, (B3, Tk3, D3), jnp.float32)
    v3 = jax.random.normal(kv3, (B3, Tk3, Dv3), jnp.float32)
    vl3 = jnp.array([150, 300], dtype=jnp.int32)

    out3 = jax.block_until_ready(
        dot_product_attention(q3, k3, v3, vl3, tile_q=128, tile_k=128))
    ref3 = _reference(q3, k3, v3, vl3)
    assert out3.shape == (B3, Tq3, Dv3)
    assert jnp.allclose(out3, ref3, atol=ATOL, rtol=RTOL), "multi-ktile mismatch"

    print("KERNEL_OK")
</pallas_src>

<mosaic_0001>
module attributes {stable_mosaic.version = 11 : i64} {
  func.func @_flash_attn_kernel(%arg0: i32, %arg1: i32, %arg2: i32, %arg3: memref<2xi32, #tpu.memory_space<smem>>, %arg4: memref<1x8x16xf32, #tpu.memory_space<vmem>>, %arg5: memref<1x128x16xf32, #tpu.memory_space<vmem>>, %arg6: memref<1x128x16xf32, #tpu.memory_space<vmem>>, %arg7: memref<1x8x16xf32, #tpu.memory_space<vmem>>, %arg8: memref<8x1xf32, #tpu.memory_space<vmem>>, %arg9: memref<8x1xf32, #tpu.memory_space<vmem>>, %arg10: memref<8x16xf32, #tpu.memory_space<vmem>>) attributes {dimension_semantics = [#tpu.dimension_semantics<parallel>, #tpu.dimension_semantics<parallel>, #tpu.dimension_semantics<arbitrary>], iteration_bounds = array<i64: 2, 1, 1>, scalar_prefetch = 1 : i64, scratch_operands = 3 : i64, tpu.core_type = #tpu.core_type<tc>, window_params = [{transform_indices = @transform_0, window_bounds = array<i64: 1, 8, 16>}, {transform_indices = @transform_1, window_bounds = array<i64: 1, 128, 16>}, {transform_indices = @transform_2, window_bounds = array<i64: 1, 128, 16>}, {transform_indices = @transform_3, window_bounds = array<i64: 1, 8, 16>}]} {
    %c0_i32 = arith.constant 0 : i32
    %0 = arith.cmpi eq, %arg2, %c0_i32 : i32
    %1 = arith.extui %0 : i1 to i32
    %c0_i32_0 = arith.constant 0 : i32
    %2 = arith.cmpi ne, %1, %c0_i32_0 : i32
    scf.if %2 {
      %cst_28 = arith.constant 0xFF800000 : f32
      %47 = vector.broadcast %cst_28 : f32 to vector<8x1xf32>
      %c0_29 = arith.constant 0 : index
      %c0_30 = arith.constant 0 : index
      %48 = vector.load %arg8[%c0_29, %c0_30] : memref<8x1xf32, #tpu.memory_space<vmem>>, vector<8x1xf32>
      tpu.vector_store %arg8[%c0_29, %c0_30], %47 {strides = array<i32>} : memref<8x1xf32, #tpu.memory_space<vmem>>, vector<8x1xf32>,
      %cst_31 = arith.constant 0.000000e+00 : f32
      %49 = vector.broadcast %cst_31 : f32 to vector<8x1xf32>
      %c0_32 = arith.constant 0 : index
      %c0_33 = arith.constant 0 : index
      %50 = vector.load %arg9[%c0_32, %c0_33] : memref<8x1xf32, #tpu.memory_space<vmem>>, vector<8x1xf32>
      tpu.vector_store %arg9[%c0_32, %c0_33], %49 {strides = array<i32>} : memref<8x1xf32, #tpu.memory_space<vmem>>, vector<8x1xf32>,
      %cst_34 = arith.constant 0.000000e+00 : f32
      %51 = vector.broadcast %cst_34 : f32 to vector<8x16xf32>
      %c0_35 = arith.constant 0 : index
      %c0_36 = arith.constant 0 : index
      %52 = vector.load %arg10[%c0_35, %c0_36] : memref<8x16xf32, #tpu.memory_space<vmem>>, vector<8x16xf32>
      tpu.vector_store %arg10[%c0_35, %c0_36], %51 {strides = array<i32>} : memref<8x16xf32, #tpu.memory_space<vmem>>, vector<8x16xf32>,
    } else {
    }
    %c0 = arith.constant 0 : index
    %c0_1 = arith.constant 0 : index
    %c0_2 = arith.constant 0 : index
    %3 = vector.load %arg4[%c0, %c0_1, %c0_2] : memref<1x8x16xf32, #tpu.memory_space<vmem>>, vector<1x8x16xf32>
    %4 = vector.shape_cast %3 : vector<1x8x16xf32> to vector<8x16xf32>
    %cst = arith.constant 2.500000e-01 : f32
    %5 = vector.broadcast %cst : f32 to vector<8x16xf32>
    %6 = arith.mulf %4, %5 : vector<8x16xf32>
    %c0_3 = arith.constant 0 : index
    %c0_4 = arith.constant 0 : index
    %c0_5 = arith.constant 0 : index
    %7 = vector.load %arg5[%c0_3, %c0_4, %c0_5] : memref<1x128x16xf32, #tpu.memory_space<vmem>>, vector<1x128x16xf32>
    %8 = vector.shape_cast %7 : vector<1x128x16xf32> to vector<128x16xf32>
    %cst_6 = arith.constant dense<0.000000e+00> : vector<8x128xf32>
    %9 = tpu.matmul %6, %8, %cst_6 {dimension_numbers = #tpu.dot_dimension_numbers<[1], [1], [0], [0], [0, 0, 1, 0], [], []>} : vector<8x16xf32>, vector<128x16xf32>, vector<8x128xf32> -> vector<8x128xf32>
    %10 = arith.index_cast %arg0 : i32 to index
    %11 = memref.load %arg3[%10] : memref<2xi32, #tpu.memory_space<smem>>
    %c128_i32 = arith.constant 128 : i32
    %12 = arith.muli %arg2, %c128_i32 : i32
    %13 = tpu.iota {dimensions = array<i32: 1>} : vector<8x128xi32>
    %14 = vector.broadcast %12 : i32 to vector<8x128xi32>
    %15 = arith.addi %14, %13 : vector<8x128xi32>
    %16 = vector.broadcast %11 : i32 to vector<8x128xi32>
    %17 = arith.cmpi slt, %15, %16 : vector<8x128xi32>
    %cst_7 = arith.constant -1.000000e+06 : f32
    %18 = vector.broadcast %cst_7 : f32 to vector<8x128xf32>
    %19 = arith.select %17, %9, %18 : vector<8x128xi1>, vector<8x128xf32>
    %c0_8 = arith.constant 0 : index
    %c0_9 = arith.constant 0 : index
    %20 = vector.load %arg8[%c0_8, %c0_9] : memref<8x1xf32, #tpu.memory_space<vmem>>, vector<8x1xf32>
    %cst_10 = arith.constant dense<0xFF800000> : vector<8xf32>
    %21 = vector.multi_reduction <maximumf>, %19, %cst_10 [1] : vector<8x128xf32> to vector<8xf32>
    %22 = vector.shape_cast %21 : vector<8xf32> to vector<8x1xf32>
    %23 = arith.maximumf %20, %22 : vector<8x1xf32>
    %24 = arith.subf %20, %23 : vector<8x1xf32>
    %25 = math.exp %24 : vector<8x1xf32>
    %26 = vector.broadcast %23 : vector<8x1xf32> to vector<8x128xf32>
    %27 = arith.subf %19, %26 : vector<8x128xf32>
    %28 = math.exp %27 : vector<8x128xf32>
    %c0_11 = arith.constant 0 : index
    %c0_12 = arith.constant 0 : index
    %29 = vector.load %arg9[%c0_11, %c0_12] : memref<8x1xf32, #tpu.memory_space<vmem>>, vector<8x1xf32>
    %30 = arith.mulf %25, %29 : vector<8x1xf32>
    %cst_13 = arith.constant dense<0.000000e+00> : vector<8xf32>
    %31 = vector.multi_reduction <add>, %28, %cst_13 [1] : vector<8x128xf32> to vector<8xf32>
    %32 = vector.shape_cast %31 : vector<8xf32> to vector<8x1xf32>
    %33 = arith.addf %30, %32 : vector<8x1xf32>
    %c0_14 = arith.constant 0 : index
    %c0_15 = arith.constant 0 : index
    %34 = vector.load %arg9[%c0_14, %c0_15] : memref<8x1xf32, #tpu.memory_space<vmem>>, vector<8x1xf32>
    tpu.vector_store %arg9[%c0_14, %c0_15], %33 {strides = array<i32>} : memref<8x1xf32, #tpu.memory_space<vmem>>, vector<8x1xf32>,
    %c0_16 = arith.constant 0 : index
    %c0_17 = arith.constant 0 : index
    %35 = vector.load %arg10[%c0_16, %c0_17] : memref<8x16xf32, #tpu.memory_space<vmem>>, vector<8x16xf32>
    %36 = vector.broadcast %25 : vector<8x1xf32> to vector<8x16xf32>
    %37 = arith.mulf %36, %35 : vector<8x16xf32>
    %c0_18 = arith.constant 0 : index
    %c0_19 = arith.constant 0 : index
    %c0_20 = arith.constant 0 : index
    %38 = vector.load %arg6[%c0_18, %c0_19, %c0_20] : memref<1x128x16xf32, #tpu.memory_space<vmem>>, vector<1x128x16xf32>
    %39 = vector.shape_cast %38 : vector<1x128x16xf32> to vector<128x16xf32>
    %cst_21 = arith.constant dense<0.000000e+00> : vector<8x16xf32>
    %40 = tpu.matmul %28, %39, %cst_21 {dimension_numbers = #tpu.dot_dimension_numbers<[1], [0], [0], [1], [0, 0, 1, 1], [], []>} : vector<8x128xf32>, vector<128x16xf32>, vector<8x16xf32> -> vector<8x16xf32>
    %41 = arith.addf %37, %40 : vector<8x16xf32>
    %c0_22 = arith.constant 0 : index
    %c0_23 = arith.constant 0 : index
    %42 = vector.load %arg10[%c0_22, %c0_23] : memref<8x16xf32, #tpu.memory_space<vmem>>, vector<8x16xf32>
    tpu.vector_store %arg10[%c0_22, %c0_23], %41 {strides = array<i32>} : memref<8x16xf32, #tpu.memory_space<vmem>>, vector<8x16xf32>,
    %c0_24 = arith.constant 0 : index
    %c0_25 = arith.constant 0 : index
    %43 = vector.load %arg8[%c0_24, %c0_25] : memref<8x1xf32, #tpu.memory_space<vmem>>, vector<8x1xf32>
    tpu.vector_store %arg8[%c0_24, %c0_25], %23 {strides = array<i32>} : memref<8x1xf32, #tpu.memory_space<vmem>>, vector<8x1xf32>,
    %c0_i32_26 = arith.constant 0 : i32
    %44 = arith.cmpi eq, %arg2, %c0_i32_26 : i32
    %45 = arith.extui %44 : i1 to i32
    %c0_i32_27 = arith.constant 0 : i32
    %46 = arith.cmpi ne, %45, %c0_i32_27 : i32
    scf.if %46 {
      %c0_28 = arith.constant 0 : index
      %c0_29 = arith.constant 0 : index
      %47 = vector.load %arg9[%c0_28, %c0_29] : memref<8x1xf32, #tpu.memory_space<vmem>>, vector<8x1xf32>
      %48 = tpu.reciprocal %47 {approx = true} : vector<8x1xf32> -> vector<8x1xf32>
      %c0_30 = arith.constant 0 : index
      %c0_31 = arith.constant 0 : index
      %49 = vector.load %arg10[%c0_30, %c0_31] : memref<8x16xf32, #tpu.memory_space<vmem>>, vector<8x16xf32>
      %50 = vector.broadcast %48 : vector<8x1xf32> to vector<8x16xf32>
      %51 = arith.mulf %49, %50 : vector<8x16xf32>
      %c0_32 = arith.constant 0 : index
      %c0_33 = arith.constant 0 : index
      %c0_34 = arith.constant 0 : index
      %52 = vector.load %arg7[%c0_32, %c0_33, %c0_34] : memref<1x8x16xf32, #tpu.memory_space<vmem>>, vector<1x8x16xf32>
      %53 = vector.shape_cast %52 : vector<1x8x16xf32> to vector<8x16xf32>
      %54 = vector.shape_cast %51 : vector<8x16xf32> to vector<1x8x16xf32>
      tpu.vector_store %arg7[%c0_32, %c0_33, %c0_34], %54 {strides = array<i32>} : memref<1x8x16xf32, #tpu.memory_space<vmem>>, vector<1x8x16xf32>,
    } else {
    }
    return
  }
  func.func @transform_0(%arg0: i32, %arg1: i32, %arg2: i32, %arg3: memref<2xi32, #tpu.memory_space<smem>>) -> (i32, i32, i32) {
    %c0_i32 = arith.constant 0 : i32
    %c0_i32_0 = arith.constant 0 : i32
    return %arg0, %arg1, %c0_i32 : i32, i32, i32
  }
  func.func @transform_1(%arg0: i32, %arg1: i32, %arg2: i32, %arg3: memref<2xi32, #tpu.memory_space<smem>>) -> (i32, i32, i32) {
    %c0_i32 = arith.constant 0 : i32
    %c0_i32_0 = arith.constant 0 : i32
    return %arg0, %arg2, %c0_i32 : i32, i32, i32
  }
  func.func @transform_2(%arg0: i32, %arg1: i32, %arg2: i32, %arg3: memref<2xi32, #tpu.memory_space<smem>>) -> (i32, i32, i32) {
    %c0_i32 = arith.constant 0 : i32
    %c0_i32_0 = arith.constant 0 : i32
    return %arg0, %arg2, %c0_i32 : i32, i32, i32
  }
  func.func @transform_3(%arg0: i32, %arg1: i32, %arg2: i32, %arg3: memref<2xi32, #tpu.memory_space<smem>>) -> (i32, i32, i32) {
    %c0_i32 = arith.constant 0 : i32
    %c0_i32_0 = arith.constant 0 : i32
    return %arg0, %arg1, %c0_i32 : i32, i32, i32
  }
}

</mosaic_0001>

<llo_original>
// kernel: tpu_custom_call.1
$region0: #{tpu_custom_call.1}
  #allocation0 [shape = 'u32[]', space=smem, size = 0x4, offset = 0x4, fixed_abs, tag = 'smem constant byte address 0x4 - core index']
  #allocation1 [shape = 'u32[144,128]{1,0:T(1,128)}', space=vmem, size = 0x12000, scoped, tag = 'internal scratch']
  #allocation2 [shape = 'f32[8,1]{1,0:T(8,128)}', space=vmem, size = 0x1000, scoped, tag = 'scratch operand']
  #allocation3 [shape = 'f32[8,1]{1,0:T(8,128)}', space=vmem, size = 0x1000, scoped, tag = 'scratch operand']
  #allocation4 [shape = 'f32[8,16]{1,0:T(8,128)}', space=vmem, size = 0x1000, scoped, tag = 'scratch operand']
  #allocation5 [shape = 's32[1]{0}', space=sflag, size = 0x4, scoped, tag = 'scoped memory for tpu_custom_call.1']
  #allocation6 [shape = 'u8[512]{0}', space=smem, size = 0x200, scoped, tag = 'prefetched SMEM operand 0']
  %s0 = inlined_call_operand.vmem [shape: s32[2], index: 0, kind: input, shape index: {}]
  %s1 = inlined_call_operand.vmem [shape: f32[2,8,16], index: 1, kind: input, shape index: {}]
  %s2 = inlined_call_operand.vmem [shape: f32[2,128,16], index: 2, kind: input, shape index: {}]
  %s3 = inlined_call_operand.vmem [shape: f32[2,128,16], index: 3, kind: input, shape index: {}]
  %s4 = inlined_call_operand.hbm [shape: f32[2,8,16], index: 4, kind: output, shape index: {}]
  %s5 = sld [smem:[#allocation0]]
  $region53: #{tpu_custom_call.1} parent=0
    _
  %s7 = ssub.s32 1, %s5
  %s8 = scalar_select 0, %s7, %s5
  %s9 = sshll.u32 %s0, 4
  %s10 = int_to_ptr.vmem [resolvable:$true] %s9
  %12 = dma.vmem_to_smem %s10, 16, [#allocation6], [#allocation5]
  %13 = dma.done [#allocation5], 16
  %14 = sfence
  $region1: #{tpu_custom_call.1} parent=0
    #allocation7 [shape = 'u8[8192]{0}', space=vmem, size = 0x2000, scoped, tag = 'output window, operand 0']
    #allocation8 [shape = 's32[2]{0}', space=sflag, size = 0x8, scoped, tag = 'scoped memory for tpu_custom_call.1']
    %15 = vsyncpa [#allocation8], 0
    %s16 = scalar_lea.sflag [#allocation8], 1
    %17 = vsyncpa %s16, 0
    loop: start=0, step=1, limit=4
    $region2: #{tpu_custom_call.1} parent=1 // loop_pre_header
      _
    $region3: #{tpu_custom_call.1} parent=1 // loop_header
      %s19 = sphi 0, %s23
      %p20 = scmp.ge.s32.totalorder %s19, 4
      %s26 = sphi 0, %s45
      %s27 = sphi 0, %s41
      %s28 = sphi 0, %s37
      %s29 = sphi 0, %s26
      %s30 = sphi 0, %s27
      %s31 = sphi 0, %s28
      %s32 = sphi 0, %s29
      %s33 = sphi 0, %s30
      %s34 = sphi 0, %s31
      %s50 = sphi 0, %s52
      %s53 = sphi 0, %s50
      %s54 = sphi 0, %s53
      %s70 = sphi 0, %s54
      %s78 = sphi 0, %s80
      %s81 = sphi 0, %s78
      %s82 = sphi 0, %s81
      %s98 = sphi 0, %s82
      %s106 = sphi 0, %s108
      %s109 = sphi 0, %s106
      %s110 = sphi 0, %s109
      %s126 = sphi 0, %s110
      %s134 = sphi 0, %s136
      %s137 = sphi 0, %s134
      %s138 = sphi 0, %s137
      %s154 = sphi 0, %s138
    $region4: #{tpu_custom_call.1} parent=1 // loop_header_branch
      %22 = sbr.rel (%p20) target = $region8
    $region5: #{tpu_custom_call.1} parent=1 // loop_body
      %s24 = ssub.s32 %s19, 1
      %s25 = ssub.s32 %s19, 2
      %s35 = sadd.s32 1, %s28
      %p36 = scmp.ge.s32.totalorder %s35, 1
      %s37 = scalar_select %p36, 0, %s35
      %s38 = sadd.s32 1, %s27
      %s39 = scalar_select %p36, %s38, %s27
      %p40 = scmp.ge.s32.totalorder %s39, 1
      %s41 = scalar_select %p40, 0, %s39
      %s42 = sadd.s32 1, %s26
      %s43 = scalar_select %p40, %s42, %s26
      %p44 = scmp.ge.s32.totalorder %s43, 2
      %s45 = scalar_select %p44, 0, %s43
      %s46 = ssub.s32 %s26, %s45
      %s47 = ssub.s32 %s27, %s41
      %s48 = sor.u32 %s46, %s47
      %p49 = scmp.eq.s32.totalorder %s48, 0
      %s51 = sadd.s32 %s50, 1
      %s52 = scalar_select %p49, %s50, %s51
      %p55 = pneg %p49
      %p56 = scmp.eq.s32.totalorder %s19, 1
      %p57 = por %p55, %p56
      %p58 = scmp.ne.s32.totalorder %s50, %s53
      %p59 = scmp.eq.s32.totalorder %s19, 0
      %p60 = por %p58, %p59
      %p61 = scmp.ne.s32.totalorder %s50, %s53
      %p62 = scmp.eq.s32.totalorder %s24, 1
      %p63 = por %p61, %p62
      %p64 = scmp.ne.s32.totalorder %s53, %s54
      %p65 = scmp.eq.s32.totalorder %s24, 0
      %p66 = por %p64, %p65
      %p67 = scmp.ne.s32.totalorder %s53, %s54
      %p68 = scmp.eq.s32.totalorder %s25, 1
      %p69 = por %p67, %p68
      %p71 = scmp.ne.s32.totalorder %s54, %s70
      %p72 = scmp.eq.s32.totalorder %s25, 0
      %p73 = por %p71, %p72
      %s74 = ssub.s32 %s26, %s45
      %s75 = ssub.s32 %s28, %s37
      %s76 = sor.u32 %s74, %s75
      %p77 = scmp.eq.s32.totalorder %s76, 0
      %s79 = sadd.s32 %s78, 1
      %s80 = scalar_select %p77, %s78, %s79
      %p83 = pneg %p77
      %p84 = scmp.eq.s32.totalorder %s19, 1
      %p85 = por %p83, %p84
      %p86 = scmp.ne.s32.totalorder %s78, %s81
      %p87 = scmp.eq.s32.totalorder %s19, 0
      %p88 = por %p86, %p87
      %p89 = scmp.ne.s32.totalorder %s78, %s81
      %p90 = scmp.eq.s32.totalorder %s24, 1
      %p91 = por %p89, %p90
      %p92 = scmp.ne.s32.totalorder %s81, %s82
      %p93 = scmp.eq.s32.totalorder %s24, 0
      %p94 = por %p92, %p93
      %p95 = scmp.ne.s32.totalorder %s81, %s82
      %p96 = scmp.eq.s32.totalorder %s25, 1
      %p97 = por %p95, %p96
      %p99 = scmp.ne.s32.totalorder %s82, %s98
      %p100 = scmp.eq.s32.totalorder %s25, 0
      %p101 = por %p99, %p100
      %s102 = ssub.s32 %s26, %s45
      %s103 = ssub.s32 %s28, %s37
      %s104 = sor.u32 %s102, %s103
      %p105 = scmp.eq.s32.totalorder %s104, 0
      %s107 = sadd.s32 %s106, 1
      %s108 = scalar_select %p105, %s106, %s107
      %p111 = pneg %p105
      %p112 = scmp.eq.s32.totalorder %s19, 1
      %p113 = por %p111, %p112
      %p114 = scmp.ne.s32.totalorder %s106, %s109
      %p115 = scmp.eq.s32.totalorder %s19, 0
      %p116 = por %p114, %p115
      %p117 = scmp.ne.s32.totalorder %s106, %s109
      %p118 = scmp.eq.s32.totalorder %s24, 1
      %p119 = por %p117, %p118
      %p120 = scmp.ne.s32.totalorder %s109, %s110
      %p121 = scmp.eq.s32.totalorder %s24, 0
      %p122 = por %p120, %p121
      %p123 = scmp.ne.s32.totalorder %s109, %s110
      %p124 = scmp.eq.s32.totalorder %s25, 1
      %p125 = por %p123, %p124
      %p127 = scmp.ne.s32.totalorder %s110, %s126
      %p128 = scmp.eq.s32.totalorder %s25, 0
      %p129 = por %p127, %p128
      %s130 = ssub.s32 %s26, %s45
      %s131 = ssub.s32 %s27, %s41
      %s132 = sor.u32 %s130, %s131
      %p133 = scmp.eq.s32.totalorder %s132, 0
      %s135 = sadd.s32 %s134, 1
      %s136 = scalar_select %p133, %s134, %s135
      %p139 = pneg %p133
      %p140 = scmp.eq.s32.totalorder %s19, 1
      %p141 = por %p139, %p140
      %p142 = scmp.ne.s32.totalorder %s134, %s137
      %p143 = scmp.eq.s32.totalorder %s19, 0
      %p144 = por %p142, %p143
      %p145 = scmp.ne.s32.totalorder %s134, %s137
      %p146 = scmp.eq.s32.totalorder %s24, 1
      %p147 = por %p145, %p146
      %p148 = scmp.ne.s32.totalorder %s137, %s138
      %p149 = scmp.eq.s32.totalorder %s24, 0
      %p150 = por %p148, %p149
      %p151 = scmp.ne.s32.totalorder %s137, %s138
      %p152 = scmp.eq.s32.totalorder %s25, 1
      %p153 = por %p151, %p152
      %p155 = scmp.ne.s32.totalorder %s138, %s154
      %p156 = scmp.eq.s32.totalorder %s25, 0
      %p157 = por %p155, %p156
      %p158 = scmp.le.s32.totalorder 1, %s19
      %p159 = scmp.lt.s32.totalorder %s19, 3
      %p160 = pnand %p158, %p159
      %p161 = pneg %p160
      // Predicated region
      $region9: #{tpu_custom_call.1} parent=5 // pred_check
        _
      $region10: #{tpu_custom_call.1} parent=5 // pred_check_branch
        %163 = sbr.rel (%p160) target = $region12
      $region11: #{tpu_custom_call.1} parent=5 // pred_region
        %s164 = ssub.s32 %s19, 1
      $region12: #{tpu_custom_call.1} parent=5 // pred_fallthru
        _
      %p165 = scmp.lt.s32.totalorder %s19, 2
      // Predicated region
      $region13: #{tpu_custom_call.1} parent=5 // pred_check
        %p166 = pneg %p165
      $region14: #{tpu_custom_call.1} parent=5 // pred_check_branch
        %168 = sbr.rel (%p166) target = $region16
      $region15: #{tpu_custom_call.1} parent=5 // pred_region
        // Predicated region
        $region17: #{tpu_custom_call.1} parent=15 // pred_check
          %p169 = pneg %p60
        $region18: #{tpu_custom_call.1} parent=15 // pred_check_branch
          %171 = sbr.rel (%p169) target = $region20
        $region19: #{tpu_custom_call.1} parent=15 // pred_region
          %p172 = scmp.lt.s32.totalorder %s26, 1
          %s173 = scalar_select %p172, %s26, 1
          %p174 = scmp.lt.s32.totalorder %s27, 0
          %s175 = scalar_select %p174, %s27, 0
          %s176 = sadd.s32 %s175, %s173
          %s177 = smul.addr %s176, 8
          %s178 = scalar_lea.vmem %s1, %s177
        $region20: #{tpu_custom_call.1} parent=15 // pred_fallthru
          _
        // Predicated region
        $region21: #{tpu_custom_call.1} parent=15 // pred_check
          %p179 = pneg %p88
        $region22: #{tpu_custom_call.1} parent=15 // pred_check_branch
          %181 = sbr.rel (%p179) target = $region24
        $region23: #{tpu_custom_call.1} parent=15 // pred_region
          %s182 = smul.u32 16, %s28
          %p183 = scmp.lt.s32.totalorder %s26, 1
          %s184 = scalar_select %p183, %s26, 1
          %p185 = scmp.lt.s32.totalorder %s182, 15
          %s186 = scalar_select %p185, %s182, 15
          %s187 = smul.addr %s184, 16
          %s188 = sadd.s32 %s186, %s187
          %s189 = smul.addr %s188, 8
          %s190 = scalar_lea.vmem %s2, %s189
          %s191 = smul.u32 16, %s28
        $region24: #{tpu_custom_call.1} parent=15 // pred_fallthru
          _
        // Predicated region
        $region25: #{tpu_custom_call.1} parent=15 // pred_check
          %p192 = pneg %p116
        $region26: #{tpu_custom_call.1} parent=15 // pred_check_branch
          %194 = sbr.rel (%p192) target = $region28
        $region27: #{tpu_custom_call.1} parent=15 // pred_region
          %s195 = smul.u32 16, %s28
          %p196 = scmp.lt.s32.totalorder %s26, 1
          %s197 = scalar_select %p196, %s26, 1
          %p198 = scmp.lt.s32.totalorder %s195, 15
          %s199 = scalar_select %p198, %s195, 15
          %s200 = smul.addr %s197, 16
          %s201 = sadd.s32 %s199, %s200
          %s202 = smul.addr %s201, 8
          %s203 = scalar_lea.vmem %s3, %s202
          %s204 = smul.u32 16, %s28
        $region28: #{tpu_custom_call.1} parent=15 // pred_fallthru
          _
      $region16: #{tpu_custom_call.1} parent=5 // pred_fallthru
        _
      %p205 = scmp.le.s32.totalorder 1, %s19
      %p206 = scmp.lt.s32.totalorder %s19, 3
      %p207 = pnand %p205, %p206
      %p208 = pneg %p207
      // Predicated region
      $region29: #{tpu_custom_call.1} parent=5 // pred_check
        _
      $region30: #{tpu_custom_call.1} parent=5 // pred_check_branch
        %210 = sbr.rel (%p207) target = $region32
      $region31: #{tpu_custom_call.1} parent=5 // pred_region
        %s211 = ssub.s32 %s19, 1
        %p212 = scmp.lt.s32.totalorder %s29, 1
        %s213 = scalar_select %p212, %s29, 1
        %p214 = scmp.lt.s32.totalorder %s30, 0
        %s215 = scalar_select %p214, %s30, 0
        %s216 = sadd.s32 %s215, %s213
        %s217 = smul.addr %s216, 8
        %s218 = scalar_lea.vmem %s1, %s217
        %p219 = pneg %p66
        %p220 = pneg %p63
        %s221 = smul.u32 16, %s31
        %p222 = scmp.lt.s32.totalorder %s29, 1
        %s223 = scalar_select %p222, %s29, 1
        %p224 = scmp.lt.s32.totalorder %s221, 15
        %s225 = scalar_select %p224, %s221, 15
        %s226 = smul.addr %s223, 16
        %s227 = sadd.s32 %s225, %s226
        %s228 = smul.addr %s227, 8
        %s229 = scalar_lea.vmem %s2, %s228
        %p230 = pneg %p94
        %p231 = pneg %p91
        %s232 = smul.u32 16, %s31
        %p233 = scmp.lt.s32.totalorder %s29, 1
        %s234 = scalar_select %p233, %s29, 1
        %p235 = scmp.lt.s32.totalorder %s232, 15
        %s236 = scalar_select %p235, %s232, 15
        %s237 = smul.addr %s234, 16
        %s238 = sadd.s32 %s236, %s237
        %s239 = smul.addr %s238, 8
        %s240 = scalar_lea.vmem %s3, %s239
        %p241 = pneg %p122
        %p242 = pneg %p119
        %p243 = pneg %p150
        %p244 = pneg %p147
        %s245 = sand.u32 %s137, 1
        %s246 = scalar_lea.sflag [#allocation8], %s245
        %s247 = sand.u32 %s137, 1
        %s248 = smul.addr %s247, 8
        %s249 = scalar_lea.vmem [#allocation7], %s248
        %p250 = scmp.lt.s32.totalorder %s29, 1
        %s251 = scalar_select %p250, %s29, 1
        %p252 = scmp.lt.s32.totalorder %s30, 0
        %s253 = scalar_select %p252, %s30, 0
        %s254 = sadd.s32 %s253, %s251
        %s255 = smul.addr %s254, 8
        %s256 = scalar_lea.vmem %s1, %s255
        %s257 = smul.u32 16, %s31
        %p258 = scmp.lt.s32.totalorder %s29, 1
        %s259 = scalar_select %p258, %s29, 1
        %p260 = scmp.lt.s32.totalorder %s257, 15
        %s261 = scalar_select %p260, %s257, 15
        %s262 = smul.addr %s259, 16
        %s263 = sadd.s32 %s261, %s262
        %s264 = smul.addr %s263, 8
        %s265 = scalar_lea.vmem %s2, %s264
        %s266 = smul.u32 16, %s31
        %s267 = smul.u32 16, %s31
        %p268 = scmp.lt.s32.totalorder %s29, 1
        %s269 = scalar_select %p268, %s29, 1
        %p270 = scmp.lt.s32.totalorder %s267, 15
        %s271 = scalar_select %p270, %s267, 15
        %s272 = smul.addr %s269, 16
        %s273 = sadd.s32 %s271, %s272
        %s274 = smul.addr %s273, 8
        %s275 = scalar_lea.vmem %s3, %s274
        %s276 = smul.u32 16, %s31
        %p277 = scmp.eq.s32.totalorder %s31, 0
        // Predicated region
        $region33: #{tpu_custom_call.1} parent=31 // pred_check
          %p278 = pneg %p277
        $region34: #{tpu_custom_call.1} parent=31 // pred_check_branch
          %280 = sbr.rel (%p278) target = $region36
        $region35: #{tpu_custom_call.1} parent=31 // pred_region
          %vm281 = vcmask 7168
          %282 = vst.msk [vmem:[#allocation2] sm:$0xff] %vm281, -inf
          %283 = vst.msk [vmem:[#allocation3] sm:$0xff] %vm281, 0.0
          %vm284 = vcmask 130048
          %285 = vst.msk [vmem:[#allocation4] sm:$0xff] %vm284, 0.0
        $region36: #{tpu_custom_call.1} parent=31 // pred_fallthru
          _
        %v286 = vld [vmem:[%s256] sm:$0xff]
        %v287 = vmul.f32 %v286, 0.25
        %v288 = vld [vmem:[%s265] sm:$0xff]
        %v289 = vld [vmem:[%s265 + $0x8] sm:$0xff]
        %v290 = vld [vmem:[%s265 + $0x10] sm:$0xff]
        %v291 = vld [vmem:[%s265 + $0x18] sm:$0xff]
        %v292 = vld [vmem:[%s265 + $0x20] sm:$0xff]
        %v293 = vld [vmem:[%s265 + $0x28] sm:$0xff]
        %v294 = vld [vmem:[%s265 + $0x30] sm:$0xff]
        %v295 = vld [vmem:[%s265 + $0x38] sm:$0xff]
        %v296 = vld [vmem:[%s265 + $0x40] sm:$0xff]
        %v297 = vld [vmem:[%s265 + $0x48] sm:$0xff]
        %v298 = vld [vmem:[%s265 + $0x50] sm:$0xff]
        %v299 = vld [vmem:[%s265 + $0x58] sm:$0xff]
        %v300 = vld [vmem:[%s265 + $0x60] sm:$0xff]
        %v301 = vld [vmem:[%s265 + $0x68] sm:$0xff]
        %v302 = vld [vmem:[%s265 + $0x70] sm:$0xff]
        %v303 = vld [vmem:[%s265 + $0x78] sm:$0xff]
        %vm304 = vcmask 130048
        %v306 = vsel %vm304, %v287, 0
        %v309 = vsel %vm304, %v288, 0
        %v312 = vsel %vm304, %v289, 0
        %v315 = vsel %vm304, %v290, 0
        %v318 = vsel %vm304, %v291, 0
        %v321 = vsel %vm304, %v292, 0
        %v324 = vsel %vm304, %v293, 0
        %v327 = vsel %vm304, %v294, 0
        %v330 = vsel %vm304, %v295, 0
        %v333 = vsel %vm304, %v296, 0
        %v336 = vsel %vm304, %v297, 0
        %v339 = vsel %vm304, %v298, 0
        %v342 = vsel %vm304, %v299, 0
        %v345 = vsel %vm304, %v300, 0
        %v348 = vsel %vm304, %v301, 0
        %v351 = vsel %vm304, %v302, 0
        %v354 = vsel %vm304, %v303, 0
        %356 = vmatprep.subr.mxu0 0.0
        %357 = vmatpush1.xpose.msra.mxu0 %v309
        %358 = vmatprep.subr.mxu0 0.0
        %359 = vmatpush1.xpose.msra.mxu0 %v312
        %360 = vmatprep.subr.mxu0 0.0
        %361 = vmatpush1.xpose.msra.mxu0 %v315
        %362 = vmatprep.subr.mxu0 0.0
        %363 = vmatpush1.xpose.msra.mxu0 %v318
        %364 = vmatprep.subr.mxu0 0.0
        %365 = vmatpush1.xpose.msra.mxu0 %v321
        %366 = vmatprep.subr.mxu0 0.0
        %367 = vmatpush1.xpose.msra.mxu0 %v324
        %368 = vmatprep.subr.mxu0 0.0
        %369 = vmatpush1.xpose.msra.mxu0 %v327
        %370 = vmatprep.subr.mxu0 0.0
        %371 = vmatpush1.xpose.msra.mxu0 %v330
        %372 = vmatprep.subr.mxu0 0.0
        %373 = vmatpush1.xpose.msra.mxu0 %v333
        %374 = vmatprep.subr.mxu0 0.0
        %375 = vmatpush1.xpose.msra.mxu0 %v336
        %376 = vmatprep.subr.mxu0 0.0
        %377 = vmatpush1.xpose.msra.mxu0 %v339
        %378 = vmatprep.subr.mxu0 0.0
        %379 = vmatpush1.xpose.msra.mxu0 %v342
        %380 = vmatprep.subr.mxu0 0.0
        %381 = vmatpush1.xpose.msra.mxu0 %v345
        %382 = vmatprep.subr.mxu0 0.0
        %383 = vmatpush1.xpose.msra.mxu0 %v348
        %384 = vmatprep.subr.mxu0 0.0
        %385 = vmatpush1.xpose.msra.mxu0 %v351
        %386 = vmatprep.subr.mxu0 0.0
        %387 = vmatpush1.xpose.msra.mxu0 %v354
        %388 = vmatprep.subr.mxu0 0.0
        %389 = vmatpush1.xpose.msra.mxu0 0.0
        %390 = vmatprep.subr.mxu0 0.0
        %391 = vmatpush1.xpose.msra.mxu0 0.0
        %392 = vmatprep.subr.mxu0 0.0
        %393 = vmatpush1.xpose.msra.mxu0 0.0
        %394 = vmatprep.subr.mxu0 0.0
        %395 = vmatpush1.xpose.msra.mxu0 0.0
        %396 = vmatprep.subr.mxu0 0.0
        %397 = vmatpush1.xpose.msra.mxu0 0.0
        %398 = vmatprep.subr.mxu0 0.0
        %399 = vmatpush1.xpose.msra.mxu0 0.0
        %400 = vmatprep.subr.mxu0 0.0
        %401 = vmatpush1.xpose.msra.mxu0 0.0
        %402 = vmatprep.subr.mxu0 0.0
        %403 = vmatpush1.xpose.msra.mxu0 0.0
        %404 = vmatprep.subr.mxu0 0.0
        %405 = vmatpush1.xpose.msra.mxu0 0.0
        %406 = vmatprep.subr.mxu0 0.0
        %407 = vmatpush1.xpose.msra.mxu0 0.0
        %408 = vmatprep.subr.mxu0 0.0
        %409 = vmatpush1.xpose.msra.mxu0 0.0
        %410 = vmatprep.subr.mxu0 0.0
        %411 = vmatpush1.xpose.msra.mxu0 0.0
        %412 = vmatprep.subr.mxu0 0.0
        %413 = vmatpush1.xpose.msra.mxu0 0.0
        %414 = vmatprep.subr.mxu0 0.0
        %415 = vmatpush1.xpose.msra.mxu0 0.0
        %416 = vmatprep.subr.mxu0 0.0
        %417 = vmatpush1.xpose.msra.mxu0 0.0
        %418 = vmatprep.subr.mxu0 0.0
        %419 = vmatpush1.xpose.msra.mxu0 0.0
        %420 = vmatprep.mubr.f32.mxu0 0.0
        %421 = vmatmul.mubr.f32.gmra.mrb[0].mxu0 %v306
        %v422 = vpop.f32.mrb[0].mxu0
        %v423 = vadd.f32 0.0, %v422
        %v424 = vpop.f32.mrb[0].mxu0
        %425 = vdwg.mxu0
        %s426 = sld [smem:[#allocation6 + %s29]]
        %s427 = smul.u32 %s31, 128
        %v428 = vlaneseq
        %v429 = vand.u32 %v428, 127
        %v430 = vstv %s427
        %v431 = vadd.s32 %v430, %v429
        %v432 = vstv %s426
        %vm433 = vcmp.lt.s32.totalorder %v431, %v432
        %v434 = vsel %vm433, %v423, -1000000.0
        %v435 = vld [vmem:[#allocation2] sm:$0xff]
        %436 = vmax.xlane.f32.xlu0 %v434
        %v437 = vpop.xlane.xlu0 %436
        %v438 = vmax.f32 %v435, %v437
        %v439 = vsub.f32 %v435, %v438
        %v440 = vmul.f32 %v439, 1.442695
        %v441 = vpow.pop %v440
        %443 = vset.pattern.permute.xlu0 0
        %444 = vperm.xlu0 %443, %v438
        %v445 = vpop.permute.xlu0 %444
        %v447 = vsub.f32 %v434, %v445
        %v448 = vmul.f32 %v447, 1.442695
        %v449 = vpow.pop %v448
        %v450 = vld [vmem:[#allocation3] sm:$0xff]
        %v451 = vmul.f32 %v441, %v450
        %452 = vadd.xlane.f32.xlu0 %v449
        %v453 = vpop.xlane.xlu0 %452
        %v454 = vadd.f32 %v451, %v453
        %vm455 = vcmask 7168
        %456 = vst.msk [vmem:[#allocation3] sm:$0xff] %vm455, %v454
        %v457 = vld [vmem:[#allocation4] sm:$0xff]
        %459 = vset.pattern.permute.xlu0 0
        %460 = vperm.xlu0 %459, %v441
        %v461 = vpop.permute.xlu0 %460
        %v463 = vmul.f32 %v461, %v457
        %v464 = vld [vmem:[%s275] sm:$0xff]
        %v465 = vld [vmem:[%s275 + $0x8] sm:$0xff]
        %v466 = vld [vmem:[%s275 + $0x10] sm:$0xff]
        %v467 = vld [vmem:[%s275 + $0x18] sm:$0xff]
        %v468 = vld [vmem:[%s275 + $0x20] sm:$0xff]
        %v469 = vld [vmem:[%s275 + $0x28] sm:$0xff]
        %v470 = vld [vmem:[%s275 + $0x30] sm:$0xff]
        %v471 = vld [vmem:[%s275 + $0x38] sm:$0xff]
        %v472 = vld [vmem:[%s275 + $0x40] sm:$0xff]
        %v473 = vld [vmem:[%s275 + $0x48] sm:$0xff]
        %v474 = vld [vmem:[%s275 + $0x50] sm:$0xff]
        %v475 = vld [vmem:[%s275 + $0x58] sm:$0xff]
        %v476 = vld [vmem:[%s275 + $0x60] sm:$0xff]
        %v477 = vld [vmem:[%s275 + $0x68] sm:$0xff]
        %v478 = vld [vmem:[%s275 + $0x70] sm:$0xff]
        %v479 = vld [vmem:[%s275 + $0x78] sm:$0xff]
        %480 = vmatprep.subr.mxu0 0.0
        %481 = vmatpush1.msra.mxu0 %v464
        %482 = vmatprep.subr.mxu0 0.0
        %483 = vmatpush1.msra.mxu0 %v465
        %484 = vmatprep.subr.mxu0 0.0
        %485 = vmatpush1.msra.mxu0 %v466
        %486 = vmatprep.subr.mxu0 0.0
        %487 = vmatpush1.msra.mxu0 %v467
        %488 = vmatprep.subr.mxu0 0.0
        %489 = vmatpush1.msra.mxu0 %v468
        %490 = vmatprep.subr.mxu0 0.0
        %491 = vmatpush1.msra.mxu0 %v469
        %492 = vmatprep.subr.mxu0 0.0
        %493 = vmatpush1.msra.mxu0 %v470
        %494 = vmatprep.subr.mxu0 0.0
        %495 = vmatpush1.msra.mxu0 %v471
        %496 = vmatprep.subr.mxu0 0.0
        %497 = vmatpush1.msra.mxu0 %v472
        %498 = vmatprep.subr.mxu0 0.0
        %499 = vmatpush1.msra.mxu0 %v473
        %500 = vmatprep.subr.mxu0 0.0
        %501 = vmatpush1.msra.mxu0 %v474
        %502 = vmatprep.subr.mxu0 0.0
        %503 = vmatpush1.msra.mxu0 %v475
        %504 = vmatprep.subr.mxu0 0.0
        %505 = vmatpush1.msra.mxu0 %v476
        %506 = vmatprep.subr.mxu0 0.0
        %507 = vmatpush1.msra.mxu0 %v477
        %508 = vmatprep.subr.mxu0 0.0
        %509 = vmatpush1.msra.mxu0 %v478
        %510 = vmatprep.subr.mxu0 0.0
        %511 = vmatpush1.msra.mxu0 %v479
        %512 = vmatprep.subr.mxu0 0.0
        %513 = vmatpush1.msra.mxu0 0.0
        %514 = vmatprep.subr.mxu0 0.0
        %515 = vmatpush1.msra.mxu0 0.0
        %516 = vmatprep.subr.mxu0 0.0
        %517 = vmatpush1.msra.mxu0 0.0
        %518 = vmatprep.subr.mxu0 0.0
        %519 = vmatpush1.msra.mxu0 0.0
        %520 = vmatprep.subr.mxu0 0.0
        %521 = vmatpush1.msra.mxu0 0.0
        %522 = vmatprep.subr.mxu0 0.0
        %523 = vmatpush1.msra.mxu0 0.0
        %524 = vmatprep.subr.mxu0 0.0
        %525 = vmatpush1.msra.mxu0 0.0
        %526 = vmatprep.subr.mxu0 0.0
        %527 = vmatpush1.msra.mxu0 0.0
        %528 = vmatprep.subr.mxu0 0.0
        %529 = vmatpush1.msra.mxu0 0.0
        %530 = vmatprep.subr.mxu0 0.0
        %531 = vmatpush1.msra.mxu0 0.0
        %532 = vmatprep.subr.mxu0 0.0
        %533 = vmatpush1.msra.mxu0 0.0
        %534 = vmatprep.subr.mxu0 0.0
        %535 = vmatpush1.msra.mxu0 0.0
        %536 = vmatprep.subr.mxu0 0.0
        %537 = vmatpush1.msra.mxu0 0.0
        %538 = vmatprep.subr.mxu0 0.0
        %539 = vmatpush1.msra.mxu0 0.0
        %540 = vmatprep.subr.mxu0 0.0
        %541 = vmatpush1.msra.mxu0 0.0
        %542 = vmatprep.subr.mxu0 0.0
        %543 = vmatpush1.msra.mxu0 0.0
        %544 = vmatprep.mubr.f32.mxu0 0.0
        %545 = vmatmul.mubr.f32.gmra.mrb[0].mxu0 %v449
        %v546 = vpop.f32.mrb[0].mxu0
        %v547 = vadd.f32 0.0, %v546
        %v548 = vpop.f32.mrb[0].mxu0
        %549 = vdwg.mxu0
        %v550 = vadd.f32 %v463, %v547
        %551 = vst.msk [vmem:[#allocation4] sm:$0xff] %vm304, %v550
        %552 = vst.msk [vmem:[#allocation2] sm:$0xff] %vm455, %v438
        // Predicated region
        $region37: #{tpu_custom_call.1} parent=31 // pred_check
          %p553 = pneg %p277
        $region38: #{tpu_custom_call.1} parent=31 // pred_check_branch
          %555 = sbr.rel (%p553) target = $region40
        $region39: #{tpu_custom_call.1} parent=31 // pred_region
          %v556 = vld [vmem:[#allocation3] sm:$0xff]
          %v557 = vrcp.pop %v556
          %v558 = vld [vmem:[#allocation4] sm:$0xff]
          %560 = vset.pattern.permute.xlu0 0
          %561 = vperm.xlu0 %560, %v557
          %v562 = vpop.permute.xlu0 %561
          %v564 = vmul.f32 %v558, %v562
          %565 = vst.msk [vmem:[%s249] sm:$0xff] %vm304, %v564
        $region40: #{tpu_custom_call.1} parent=31 // pred_fallthru
          _
        %s566 = sand.u32 %s137, 1
        %s567 = scalar_lea.sflag [#allocation8], %s566
        %s568 = sand.u32 %s137, 1
        %s569 = smul.addr %s568, 8
        %s570 = scalar_lea.vmem [#allocation7], %s569
        // Predicated region
        $region41: #{tpu_custom_call.1} parent=31 // pred_check
          %p571 = pneg %p147
        $region42: #{tpu_custom_call.1} parent=31 // pred_check_branch
          %573 = sbr.rel (%p571) target = $region44
        $region43: #{tpu_custom_call.1} parent=31 // pred_region
          %s575 = ssub.s32 128, 128
          %576 = vsyncadd %s567, %s575
          %s577 = sadd.s32 %s30, %s29
          %s578 = smul.addr %s577, 128
          %s579 = scalar_lea.hbm %s4, %s578
          %s581 = sshll.u32 %s570, 4
          %s582 = int_to_ptr.vmem [resolvable:$true] %s581
          %584 = dma.vmem_to_hbm [thread:$0]  %s582, 128, %s579, %s567
        $region44: #{tpu_custom_call.1} parent=31 // pred_fallthru
          _
      $region32: #{tpu_custom_call.1} parent=5 // pred_fallthru
        _
      %p585 = scmp.le.s32.totalorder 2, %s19
      // Predicated region
      $region45: #{tpu_custom_call.1} parent=5 // pred_check
        %p586 = pneg %p585
      $region46: #{tpu_custom_call.1} parent=5 // pred_check_branch
        %588 = sbr.rel (%p586) target = $region48
      $region47: #{tpu_custom_call.1} parent=5 // pred_region
        %s589 = ssub.s32 %s19, 2
        // Predicated region
        $region49: #{tpu_custom_call.1} parent=47 // pred_check
          %p590 = pneg %p153
        $region50: #{tpu_custom_call.1} parent=47 // pred_check_branch
          %592 = sbr.rel (%p590) target = $region52
        $region51: #{tpu_custom_call.1} parent=47 // pred_region
          %s593 = sand.u32 %s138, 1
          %s594 = scalar_lea.sflag [#allocation8], %s593
          %s595 = sand.u32 %s138, 1
          %s596 = smul.addr %s595, 8
          %s597 = scalar_lea.vmem [#allocation7], %s596
          %598 = dma.done %s594, 128
        $region52: #{tpu_custom_call.1} parent=47 // pred_fallthru
          _
      $region48: #{tpu_custom_call.1} parent=5 // pred_fallthru
        _
    $region6: #{tpu_custom_call.1} parent=1 // loop_footer
      %s23 = sadd.s32 1, %s19
    $region7: #{tpu_custom_call.1} parent=1 // loop_footer_branch
      %18 = sbr.rel target = $region3
    $region8: #{tpu_custom_call.1} parent=1 // loop_exit
      _
    %599 = vsyncpa [#allocation8], 1
    %s600 = scalar_lea.sflag [#allocation8], 1
    %601 = vsyncpa %s600, 1

</llo_original>
